<compile_context>
chip_gen: v7x
topology: tpu7x:2x2x1
jax: 0.10.0
libtpu: 0.0.40
codegen_flags: <defaults>
</compile_context>

<pallas_src>
import jax
import jax.numpy as jnp
from jax.experimental import pallas as pl
from jax.experimental.pallas import tpu as pltpu

_LANES = 128


def _sse_partial_kernel(out_ref, y_ref, partial_ref, acc_ref):
    """Accumulates sum((out - y)^2) along the inner grid axis into an (8,128) partial."""
    i = pl.program_id(1)

    @pl.when(i == 0)
    def _zero():
        acc_ref[...] = jnp.zeros_like(acc_ref)

    # Cast per-tile (in-register) so HBM streams the original dtype; accumulate in f32.
    diff = out_ref[...].astype(jnp.float32) - y_ref[...].astype(jnp.float32)
    acc_ref[...] += diff * diff  # pure VPU work in the hot loop

    @pl.when(i == pl.num_programs(1) - 1)
    def _finalize():
        tm = acc_ref.shape[0]
        # Fold (TM,128) -> (8,128): layout-preserving reshape + vreg adds (no XLU in loop).
        folded = jnp.sum(acc_ref[...].reshape(tm // 8, 8, _LANES), axis=0)
        partial_ref[...] = folded.reshape(1, 8, _LANES)


def _make_finalize_kernel(numel):
    """Combines SSE partials with the KL term; numel is static for the MSE mean."""

    def kernel(partials_ref, mu_ref, var_ref, loss_ref):
        sse = jnp.sum(partials_ref[...])
        r_loss = jnp.sqrt(sse / jnp.float32(numel))

        mu = mu_ref[...].astype(jnp.float32)
        var = var_ref[...].astype(jnp.float32)  # log-variance, as in the module
        kl = -0.5 * jnp.sum(1.0 + var - mu * mu - jnp.exp(var))

        loss_ref[0, 0] = r_loss + kl

    return kernel


def vae_loss(pred, y, *, num_partials=2, max_tm=2048):
    """pred = (mu, var, out); mirrors VAE_Loss.forward. Returns a scalar f32."""
    mu, var, out = pred
    numel = out.size

    # ---- flatten (and zero-pad) the reconstruction tensors to a lane-dense slab ----
    rows = -(-numel // _LANES)
    # Rows per tile: multiple of 16 sublanes (bf16-safe), capped so that
    # 2 inputs x 2 pipeline buffers + accumulator stay a few MiB on every generation.
    tm = -(-rows // num_partials)
    tm = max(16, min(max_tm, ((tm + 15) // 16) * 16))
    rows_padded = -(-rows // (tm * num_partials)) * (tm * num_partials)
    steps = rows_padded // (tm * num_partials)

    out_flat = out.reshape(-1)
    y_flat = y.reshape(-1)
    pad = rows_padded * _LANES - numel
    if pad:
        # Identical zero padding of both tensors => diff == 0 on the pad (SSE unchanged).
        out_flat = jnp.pad(out_flat, (0, pad))
        y_flat = jnp.pad(y_flat, (0, pad))
    out2 = out_flat.reshape(rows_padded, _LANES)
    y2 = y_flat.reshape(rows_padded, _LANES)

    # ---- stage 1: streaming partial SSE (double-buffered by BlockSpec pipelining) ----
    partials = pl.pallas_call(
        _sse_partial_kernel,
        out_shape=jax.ShapeDtypeStruct((num_partials, 8, _LANES), jnp.float32),
        grid_spec=pltpu.PrefetchScalarGridSpec(
            num_scalar_prefetch=0,
            grid=(num_partials, steps),
            in_specs=[
                pl.BlockSpec((tm, _LANES), lambda p, i: (p * steps + i, 0)),
                pl.BlockSpec((tm, _LANES), lambda p, i: (p * steps + i, 0)),
            ],
            out_specs=pl.BlockSpec((1, 8, _LANES), lambda p, i: (p, 0, 0)),
            scratch_shapes=[pltpu.VMEM((tm, _LANES), jnp.float32)],
        ),
        compiler_params=pltpu.CompilerParams(
            dimension_semantics=("parallel", "arbitrary"),
        ),
    )(out2, y2)

    # ---- stage 2: combine partials + KL (tiny, single invocation) ----
    loss = pl.pallas_call(
        _make_finalize_kernel(numel),
        out_shape=jax.ShapeDtypeStruct((1, 1), jnp.float32),
        in_specs=[
            pl.BlockSpec(memory_space=pltpu.VMEM),  # SSE partials
            pl.BlockSpec(memory_space=pltpu.VMEM),  # mu
            pl.BlockSpec(memory_space=pltpu.VMEM),  # var (log-variance)
        ],
        out_specs=pl.BlockSpec(memory_space=pltpu.SMEM),
    )(partials, mu, var)

    return loss[0, 0]


def vae_loss_ref(pred, y):
    mu, var, out = pred
    r_loss = jnp.sqrt(jnp.mean((out.astype(jnp.float32) - y.astype(jnp.float32)) ** 2))
    kl_loss = -0.5 * jnp.sum(1.0 + var - jnp.square(mu) - jnp.exp(var))
    return r_loss + kl_loss


if __name__ == "__main__":
    key = jax.random.PRNGKey(0)
    k_out, k_y, k_mu, k_var = jax.random.split(key, 4)

    # Shapes consistent with a small CVAE: decoder output / target NCHW (2, 4, 16, 16),
    # latent stats (2, 32).
    N, C, H, W = 2, 4, 16, 16
    LATENT = 32

    out = jax.random.normal(k_out, (N, C, H, W), dtype=jnp.float32)
    y = jax.random.normal(k_y, (N, C, H, W), dtype=jnp.float32)
    mu = 0.1 * jax.random.normal(k_mu, (N, LATENT), dtype=jnp.float32)
    var = 0.1 * jax.random.normal(k_var, (N, LATENT), dtype=jnp.float32)  # log-variance

    loss = jax.block_until_ready(vae_loss((mu, var, out), y))
    ref = jax.block_until_ready(vae_loss_ref((mu, var, out), y))
    assert jnp.allclose(loss, ref, rtol=1e-5, atol=1e-5), (loss, ref)

    # Exercise the zero-padding path (numel not a multiple of 128).
    out_odd = jax.random.normal(k_out, (2, 3, 7, 5), dtype=jnp.float32)
    y_odd = jax.random.normal(k_y, (2, 3, 7, 5), dtype=jnp.float32)
    loss_odd = jax.block_until_ready(vae_loss((mu, var, out_odd), y_odd))
    ref_odd = jax.block_until_ready(vae_loss_ref((mu, var, out_odd), y_odd))
    assert jnp.allclose(loss_odd, ref_odd, rtol=1e-5, atol=1e-5), (loss_odd, ref_odd)

    print("KERNEL_OK")
</pallas_src>

<mosaic_0001>
module attributes {stable_mosaic.version = 11 : i64} {
  func.func @_sse_partial_kernel(%arg0: i32, %arg1: i32, %arg2: memref<16x128xf32, #tpu.memory_space<vmem>>, %arg3: memref<16x128xf32, #tpu.memory_space<vmem>>, %arg4: memref<1x8x128xf32, #tpu.memory_space<vmem>>, %arg5: memref<16x128xf32, #tpu.memory_space<vmem>>) attributes {dimension_semantics = [#tpu.dimension_semantics<parallel>, #tpu.dimension_semantics<arbitrary>], iteration_bounds = array<i64: 2, 1>, scalar_prefetch = 0 : i64, scratch_operands = 1 : i64, tpu.core_type = #tpu.core_type<tc>, window_params = [{transform_indices = @transform_0, window_bounds = array<i64: 16, 128>}, {transform_indices = @transform_1, window_bounds = array<i64: 16, 128>}, {transform_indices = @transform_2, window_bounds = array<i64: 1, 8, 128>}]} {
    %c0_i32 = arith.constant 0 : i32
    %0 = arith.cmpi eq, %arg1, %c0_i32 : i32
    %1 = arith.extui %0 : i1 to i32
    %c0_i32_0 = arith.constant 0 : i32
    %2 = arith.cmpi ne, %1, %c0_i32_0 : i32
    scf.if %2 {
      %cst = arith.constant 0.000000e+00 : f32
      %13 = vector.broadcast %cst : f32 to vector<16x128xf32>
      %c0_10 = arith.constant 0 : index
      %c0_11 = arith.constant 0 : index
      %14 = vector.load %arg5[%c0_10, %c0_11] : memref<16x128xf32, #tpu.memory_space<vmem>>, vector<16x128xf32>
      tpu.vector_store %arg5[%c0_10, %c0_11], %13 {strides = array<i32>} : memref<16x128xf32, #tpu.memory_space<vmem>>, vector<16x128xf32>,
    } else {
    }
    %c0 = arith.constant 0 : index
    %c0_1 = arith.constant 0 : index
    %3 = vector.load %arg2[%c0, %c0_1] : memref<16x128xf32, #tpu.memory_space<vmem>>, vector<16x128xf32>
    %c0_2 = arith.constant 0 : index
    %c0_3 = arith.constant 0 : index
    %4 = vector.load %arg3[%c0_2, %c0_3] : memref<16x128xf32, #tpu.memory_space<vmem>>, vector<16x128xf32>
    %5 = arith.subf %3, %4 : vector<16x128xf32>
    %c0_4 = arith.constant 0 : index
    %c0_5 = arith.constant 0 : index
    %6 = vector.load %arg5[%c0_4, %c0_5] : memref<16x128xf32, #tpu.memory_space<vmem>>, vector<16x128xf32>
    %7 = arith.mulf %5, %5 : vector<16x128xf32>
    %8 = arith.addf %6, %7 : vector<16x128xf32>
    %c0_6 = arith.constant 0 : index
    %c0_7 = arith.constant 0 : index
    %9 = vector.load %arg5[%c0_6, %c0_7] : memref<16x128xf32, #tpu.memory_space<vmem>>, vector<16x128xf32>
    tpu.vector_store %arg5[%c0_6, %c0_7], %8 {strides = array<i32>} : memref<16x128xf32, #tpu.memory_space<vmem>>, vector<16x128xf32>,
    %c0_i32_8 = arith.constant 0 : i32
    %10 = arith.cmpi eq, %arg1, %c0_i32_8 : i32
    %11 = arith.extui %10 : i1 to i32
    %c0_i32_9 = arith.constant 0 : i32
    %12 = arith.cmpi ne, %11, %c0_i32_9 : i32
    scf.if %12 {
      %c0_10 = arith.constant 0 : index
      %c0_11 = arith.constant 0 : index
      %13 = vector.load %arg5[%c0_10, %c0_11] : memref<16x128xf32, #tpu.memory_space<vmem>>, vector<16x128xf32>
      %14 = vector.shape_cast %13 : vector<16x128xf32> to vector<2x8x128xf32>
      %cst = arith.constant dense<0.000000e+00> : vector<8x128xf32>
      %15 = vector.multi_reduction <add>, %14, %cst [0] : vector<2x8x128xf32> to vector<8x128xf32>
      %16 = vector.shape_cast %15 : vector<8x128xf32> to vector<1x8x128xf32>
      %c0_12 = arith.constant 0 : index
      %c0_13 = arith.constant 0 : index
      %c0_14 = arith.constant 0 : index
      %17 = vector.load %arg4[%c0_12, %c0_13, %c0_14] : memref<1x8x128xf32, #tpu.memory_space<vmem>>, vector<1x8x128xf32>
      tpu.vector_store %arg4[%c0_12, %c0_13, %c0_14], %16 {strides = array<i32>} : memref<1x8x128xf32, #tpu.memory_space<vmem>>, vector<1x8x128xf32>,
    } else {
    }
    return
  }
  func.func @transform_0(%arg0: i32, %arg1: i32) -> (i32, i32) {
    %c1_i32 = arith.constant 1 : i32
    %0 = arith.muli %arg0, %c1_i32 : i32
    %1 = arith.addi %0, %arg1 : i32
    %c0_i32 = arith.constant 0 : i32
    %c0_i32_0 = arith.constant 0 : i32
    return %1, %c0_i32 : i32, i32
  }
  func.func @transform_1(%arg0: i32, %arg1: i32) -> (i32, i32) {
    %c1_i32 = arith.constant 1 : i32
    %0 = arith.muli %arg0, %c1_i32 : i32
    %1 = arith.addi %0, %arg1 : i32
    %c0_i32 = arith.constant 0 : i32
    %c0_i32_0 = arith.constant 0 : i32
    return %1, %c0_i32 : i32, i32
  }
  func.func @transform_2(%arg0: i32, %arg1: i32) -> (i32, i32, i32) {
    %c0_i32 = arith.constant 0 : i32
    %c0_i32_0 = arith.constant 0 : i32
    %c0_i32_1 = arith.constant 0 : i32
    return %arg0, %c0_i32, %c0_i32_0 : i32, i32, i32
  }
}

</mosaic_0001>

<llo_original>
// kernel: tpu_custom_call.1
$region0: #{tpu_custom_call.1}
  #allocation0 [shape = 'u32[]', space=smem, size = 0x4, offset = 0x4, fixed_abs, tag = 'smem constant byte address 0x4 - core index']
  #allocation1 [shape = 'u32[144,128]{1,0:T(1,128)}', space=vmem, size = 0x12000, scoped, tag = 'internal scratch']
  #allocation2 [shape = 'f32[16,128]{1,0:T(8,128)}', space=vmem, size = 0x2000, scoped, tag = 'scratch operand']
  %s0 = inlined_call_operand.hbm [shape: f32[32,128], index: 0, kind: input, shape index: {}]
  %s1 = inlined_call_operand.hbm [shape: f32[32,128], index: 1, kind: input, shape index: {}]
  %s2 = inlined_call_operand.hbm [shape: f32[2,8,128], index: 2, kind: output, shape index: {}]
  %s3 = sld [smem:[#allocation0]]
  $region57: #{tpu_custom_call.1} parent=0
    _
  %s5 = ssub.s32 1, %s3
  %s6 = scalar_select 0, %s5, %s3
  $region1: #{tpu_custom_call.1} parent=0
    #allocation3 [shape = 'u8[16384]{0}', space=vmem, size = 0x4000, scoped, tag = 'input window, operand 0']
    #allocation4 [shape = 's32[2]{0}', space=sflag, size = 0x8, scoped, tag = 'scoped memory for tpu_custom_call.1']
    #allocation5 [shape = 's32[2]{0}', space=sflag, size = 0x8, scoped, tag = 'scoped memory for tpu_custom_call.1']
    #allocation6 [shape = 'u8[16384]{0}', space=vmem, size = 0x4000, scoped, tag = 'input window, operand 1']
    #allocation7 [shape = 's32[2]{0}', space=sflag, size = 0x8, scoped, tag = 'scoped memory for tpu_custom_call.1']
    #allocation8 [shape = 'u8[8192]{0}', space=vmem, size = 0x2000, scoped, tag = 'output window, operand 0']
    %7 = vsyncpa [#allocation4], 0
    %s8 = scalar_lea.sflag [#allocation4], 1
    %9 = vsyncpa %s8, 0
    %10 = vsyncpa [#allocation7], 0
    %s11 = scalar_lea.sflag [#allocation7], 1
    %12 = vsyncpa %s11, 0
    %13 = vsyncpa [#allocation5], 0
    %s14 = scalar_lea.sflag [#allocation5], 1
    %15 = vsyncpa %s14, 0
    loop: start=0, step=1, limit=4
    $region2: #{tpu_custom_call.1} parent=1 // loop_pre_header
      _
    $region3: #{tpu_custom_call.1} parent=1 // loop_header
      %s17 = sphi 0, %s21
      %p18 = scmp.ge.s32.totalorder %s17, 4
      %s24 = sphi 0, %s36
      %s25 = sphi 0, %s32
      %s26 = sphi 0, %s24
      %s27 = sphi 0, %s25
      %s28 = sphi 0, %s26
      %s29 = sphi 0, %s27
      %s41 = sphi 0, %s43
      %s44 = sphi 0, %s41
      %s45 = sphi 0, %s44
      %s61 = sphi 0, %s45
      %s69 = sphi 0, %s71
      %s72 = sphi 0, %s69
      %s73 = sphi 0, %s72
      %s89 = sphi 0, %s73
      %s95 = sphi 0, %s97
      %s98 = sphi 0, %s95
      %s99 = sphi 0, %s98
      %s115 = sphi 0, %s99
    $region4: #{tpu_custom_call.1} parent=1 // loop_header_branch
      %20 = sbr.rel (%p18) target = $region8
    $region5: #{tpu_custom_call.1} parent=1 // loop_body
      %s22 = ssub.s32 %s17, 1
      %s23 = ssub.s32 %s17, 2
      %s30 = sadd.s32 1, %s25
      %p31 = scmp.ge.s32.totalorder %s30, 1
      %s32 = scalar_select %p31, 0, %s30
      %s33 = sadd.s32 1, %s24
      %s34 = scalar_select %p31, %s33, %s24
      %p35 = scmp.ge.s32.totalorder %s34, 2
      %s36 = scalar_select %p35, 0, %s34
      %s37 = sadd.s32 %s24, %s25
      %s38 = sadd.s32 %s36, %s32
      %s39 = ssub.s32 %s37, %s38
      %p40 = scmp.eq.s32.totalorder %s39, 0
      %s42 = sadd.s32 %s41, 1
      %s43 = scalar_select %p40, %s41, %s42
      %p46 = pneg %p40
      %p47 = scmp.eq.s32.totalorder %s17, 1
      %p48 = por %p46, %p47
      %p49 = scmp.ne.s32.totalorder %s41, %s44
      %p50 = scmp.eq.s32.totalorder %s17, 0
      %p51 = por %p49, %p50
      %p52 = scmp.ne.s32.totalorder %s41, %s44
      %p53 = scmp.eq.s32.totalorder %s22, 1
      %p54 = por %p52, %p53
      %p55 = scmp.ne.s32.totalorder %s44, %s45
      %p56 = scmp.eq.s32.totalorder %s22, 0
      %p57 = por %p55, %p56
      %p58 = scmp.ne.s32.totalorder %s44, %s45
      %p59 = scmp.eq.s32.totalorder %s23, 1
      %p60 = por %p58, %p59
      %p62 = scmp.ne.s32.totalorder %s45, %s61
      %p63 = scmp.eq.s32.totalorder %s23, 0
      %p64 = por %p62, %p63
      %s65 = sadd.s32 %s24, %s25
      %s66 = sadd.s32 %s36, %s32
      %s67 = ssub.s32 %s65, %s66
      %p68 = scmp.eq.s32.totalorder %s67, 0
      %s70 = sadd.s32 %s69, 1
      %s71 = scalar_select %p68, %s69, %s70
      %p74 = pneg %p68
      %p75 = scmp.eq.s32.totalorder %s17, 1
      %p76 = por %p74, %p75
      %p77 = scmp.ne.s32.totalorder %s69, %s72
      %p78 = scmp.eq.s32.totalorder %s17, 0
      %p79 = por %p77, %p78
      %p80 = scmp.ne.s32.totalorder %s69, %s72
      %p81 = scmp.eq.s32.totalorder %s22, 1
      %p82 = por %p80, %p81
      %p83 = scmp.ne.s32.totalorder %s72, %s73
      %p84 = scmp.eq.s32.totalorder %s22, 0
      %p85 = por %p83, %p84
      %p86 = scmp.ne.s32.totalorder %s72, %s73
      %p87 = scmp.eq.s32.totalorder %s23, 1
      %p88 = por %p86, %p87
      %p90 = scmp.ne.s32.totalorder %s73, %s89
      %p91 = scmp.eq.s32.totalorder %s23, 0
      %p92 = por %p90, %p91
      %s93 = ssub.s32 %s24, %s36
      %p94 = scmp.eq.s32.totalorder %s93, 0
      %s96 = sadd.s32 %s95, 1
      %s97 = scalar_select %p94, %s95, %s96
      %p100 = pneg %p94
      %p101 = scmp.eq.s32.totalorder %s17, 1
      %p102 = por %p100, %p101
      %p103 = scmp.ne.s32.totalorder %s95, %s98
      %p104 = scmp.eq.s32.totalorder %s17, 0
      %p105 = por %p103, %p104
      %p106 = scmp.ne.s32.totalorder %s95, %s98
      %p107 = scmp.eq.s32.totalorder %s22, 1
      %p108 = por %p106, %p107
      %p109 = scmp.ne.s32.totalorder %s98, %s99
      %p110 = scmp.eq.s32.totalorder %s22, 0
      %p111 = por %p109, %p110
      %p112 = scmp.ne.s32.totalorder %s98, %s99
      %p113 = scmp.eq.s32.totalorder %s23, 1
      %p114 = por %p112, %p113
      %p116 = scmp.ne.s32.totalorder %s99, %s115
      %p117 = scmp.eq.s32.totalorder %s23, 0
      %p118 = por %p116, %p117
      %p119 = scmp.le.s32.totalorder 1, %s17
      %p120 = scmp.lt.s32.totalorder %s17, 3
      %p121 = pnand %p119, %p120
      %p122 = pneg %p121
      // Predicated region
      $region9: #{tpu_custom_call.1} parent=5 // pred_check
        _
      $region10: #{tpu_custom_call.1} parent=5 // pred_check_branch
        %124 = sbr.rel (%p121) target = $region12
      $region11: #{tpu_custom_call.1} parent=5 // pred_region
        %s125 = ssub.s32 %s17, 1
      $region12: #{tpu_custom_call.1} parent=5 // pred_fallthru
        _
      %p126 = scmp.lt.s32.totalorder %s17, 2
      // Predicated region
      $region13: #{tpu_custom_call.1} parent=5 // pred_check
        %p127 = pneg %p126
      $region14: #{tpu_custom_call.1} parent=5 // pred_check_branch
        %129 = sbr.rel (%p127) target = $region16
      $region15: #{tpu_custom_call.1} parent=5 // pred_region
        // Predicated region
        $region17: #{tpu_custom_call.1} parent=15 // pred_check
          %p130 = pneg %p51
        $region18: #{tpu_custom_call.1} parent=15 // pred_check_branch
          %132 = sbr.rel (%p130) target = $region20
        $region19: #{tpu_custom_call.1} parent=15 // pred_region
          %s133 = sand.u32 %s41, 1
          %s134 = scalar_lea.sflag [#allocation4], %s133
          %s135 = sand.u32 %s41, 1
          %s136 = smul.addr %s135, 16
          %s137 = scalar_lea.vmem [#allocation3], %s136
          %s138 = sadd.s32 %s24, %s25
          %s139 = smul.u32 2, %s138
          %s141 = ssub.s32 256, 256
          %142 = vsyncadd %s134, %s141
          %s143 = smul.addr %s139, 128
          %s144 = scalar_lea.hbm %s0, %s143
          %s145 = sshll.u32 %s137, 4
          %s146 = int_to_ptr.vmem [resolvable:$true] %s145
          %151 = dma.hbm_to_vmem [thread:$0]  %s144, 256, %s146, %s134, 128, 128, 8
        $region20: #{tpu_custom_call.1} parent=15 // pred_fallthru
          _
        // Predicated region
        $region21: #{tpu_custom_call.1} parent=15 // pred_check
          %p152 = pneg %p79
        $region22: #{tpu_custom_call.1} parent=15 // pred_check_branch
          %154 = sbr.rel (%p152) target = $region24
        $region23: #{tpu_custom_call.1} parent=15 // pred_region
          %s155 = sand.u32 %s69, 1
          %s156 = scalar_lea.sflag [#allocation7], %s155
          %s157 = sand.u32 %s69, 1
          %s158 = smul.addr %s157, 16
          %s159 = scalar_lea.vmem [#allocation6], %s158
          %s160 = sadd.s32 %s24, %s25
          %s161 = smul.u32 2, %s160
          %s163 = ssub.s32 256, 256
          %164 = vsyncadd %s156, %s163
          %s165 = smul.addr %s161, 128
          %s166 = scalar_lea.hbm %s1, %s165
          %s167 = sshll.u32 %s159, 4
          %s168 = int_to_ptr.vmem [resolvable:$true] %s167
          %173 = dma.hbm_to_vmem [thread:$0]  %s166, 256, %s168, %s156, 128, 128, 8
        $region24: #{tpu_custom_call.1} parent=15 // pred_fallthru
          _
      $region16: #{tpu_custom_call.1} parent=5 // pred_fallthru
        _
      %p174 = scmp.le.s32.totalorder 1, %s17
      %p175 = scmp.lt.s32.totalorder %s17, 3
      %p176 = pnand %p174, %p175
      %p177 = pneg %p176
      // Predicated region
      $region25: #{tpu_custom_call.1} parent=5 // pred_check
        _
      $region26: #{tpu_custom_call.1} parent=5 // pred_check_branch
        %179 = sbr.rel (%p176) target = $region28
      $region27: #{tpu_custom_call.1} parent=5 // pred_region
        %s180 = ssub.s32 %s17, 1
        %s181 = sand.u32 %s44, 1
        %s182 = scalar_lea.sflag [#allocation4], %s181
        %s183 = sand.u32 %s44, 1
        %s184 = smul.addr %s183, 16
        %s185 = scalar_lea.vmem [#allocation3], %s184
        // Predicated region
        $region29: #{tpu_custom_call.1} parent=27 // pred_check
          %p186 = pneg %p57
        $region30: #{tpu_custom_call.1} parent=27 // pred_check_branch
          %188 = sbr.rel (%p186) target = $region32
        $region31: #{tpu_custom_call.1} parent=27 // pred_region
          %189 = dma.done %s182, 256
        $region32: #{tpu_custom_call.1} parent=27 // pred_fallthru
          _
        %s190 = sand.u32 %s72, 1
        %s191 = scalar_lea.sflag [#allocation7], %s190
        %s192 = sand.u32 %s72, 1
        %s193 = smul.addr %s192, 16
        %s194 = scalar_lea.vmem [#allocation6], %s193
        // Predicated region
        $region33: #{tpu_custom_call.1} parent=27 // pred_check
          %p195 = pneg %p85
        $region34: #{tpu_custom_call.1} parent=27 // pred_check_branch
          %197 = sbr.rel (%p195) target = $region36
        $region35: #{tpu_custom_call.1} parent=27 // pred_region
          %198 = dma.done %s191, 256
        $region36: #{tpu_custom_call.1} parent=27 // pred_fallthru
          _
        %s199 = sand.u32 %s44, 1
        %s200 = scalar_lea.sflag [#allocation4], %s199
        %s201 = sand.u32 %s44, 1
        %s202 = smul.addr %s201, 16
        %s203 = scalar_lea.vmem [#allocation3], %s202
        %p204 = pneg %p57
        %p205 = pneg %p54
        %s206 = sand.u32 %s72, 1
        %s207 = scalar_lea.sflag [#allocation7], %s206
        %s208 = sand.u32 %s72, 1
        %s209 = smul.addr %s208, 16
        %s210 = scalar_lea.vmem [#allocation6], %s209
        %p211 = pneg %p85
        %p212 = pneg %p82
        %p213 = pneg %p111
        %p214 = pneg %p108
        %s215 = sand.u32 %s98, 1
        %s216 = scalar_lea.sflag [#allocation5], %s215
        %s217 = sand.u32 %s98, 1
        %s218 = smul.addr %s217, 8
        %s219 = scalar_lea.vmem [#allocation8], %s218
        %s220 = sadd.s32 %s26, %s27
        %s221 = smul.u32 2, %s220
        %s222 = sadd.s32 %s26, %s27
        %s223 = smul.u32 2, %s222
        %p224 = scmp.eq.s32.totalorder %s27, 0
        // Predicated region
        $region37: #{tpu_custom_call.1} parent=27 // pred_check
          %p225 = pneg %p224
        $region38: #{tpu_custom_call.1} parent=27 // pred_check_branch
          %227 = sbr.rel (%p225) target = $region40
        $region39: #{tpu_custom_call.1} parent=27 // pred_region
          %228 = vst [vmem:[#allocation2] sm:$0xff] 0.0
          %229 = vst [vmem:[#allocation2 + $0x8] sm:$0xff] 0.0
        $region40: #{tpu_custom_call.1} parent=27 // pred_fallthru
          _
        %v230 = vld [vmem:[%s185] sm:$0xff]
        %v231 = vld [vmem:[%s185 + $0x8] sm:$0xff]
        %v232 = vld [vmem:[%s194] sm:$0xff]
        %v233 = vld [vmem:[%s194 + $0x8] sm:$0xff]
        %v234 = vsub.f32 %v230, %v232
        %v235 = vsub.f32 %v231, %v233
        %v236 = vld [vmem:[#allocation2] sm:$0xff]
        %v237 = vld [vmem:[#allocation2 + $0x8] sm:$0xff]
        %v238 = vmul.f32 %v234, %v234
        %v239 = vmul.f32 %v235, %v235
        %v240 = vadd.f32 %v236, %v238
        %v241 = vadd.f32 %v237, %v239
        %242 = vst [vmem:[#allocation2] sm:$0xff] %v240
        %243 = vst [vmem:[#allocation2 + $0x8] sm:$0xff] %v241
        // Predicated region
        $region41: #{tpu_custom_call.1} parent=27 // pred_check
          %p244 = pneg %p224
        $region42: #{tpu_custom_call.1} parent=27 // pred_check_branch
          %246 = sbr.rel (%p244) target = $region44
        $region43: #{tpu_custom_call.1} parent=27 // pred_region
          %v247 = vld [vmem:[#allocation2] sm:$0xff]
          %v248 = vld [vmem:[#allocation2 + $0x8] sm:$0xff]
          %v249 = vadd.f32 %v247, %v248
          %250 = vst [vmem:[%s219] sm:$0xff] %v249
        $region44: #{tpu_custom_call.1} parent=27 // pred_fallthru
          _
        %s251 = sand.u32 %s98, 1
        %s252 = scalar_lea.sflag [#allocation5], %s251
        %s253 = sand.u32 %s98, 1
        %s254 = smul.addr %s253, 8
        %s255 = scalar_lea.vmem [#allocation8], %s254
        // Predicated region
        $region45: #{tpu_custom_call.1} parent=27 // pred_check
          %p256 = pneg %p108
        $region46: #{tpu_custom_call.1} parent=27 // pred_check_branch
          %258 = sbr.rel (%p256) target = $region48
        $region47: #{tpu_custom_call.1} parent=27 // pred_region
          %s260 = ssub.s32 128, 128
          %261 = vsyncadd %s252, %s260
          %s262 = smul.addr %s26, 128
          %s263 = scalar_lea.hbm %s2, %s262
          %s265 = sshll.u32 %s255, 4
          %s266 = int_to_ptr.vmem [resolvable:$true] %s265
          %268 = dma.vmem_to_hbm [thread:$0]  %s266, 128, %s263, %s252
        $region48: #{tpu_custom_call.1} parent=27 // pred_fallthru
          _
      $region28: #{tpu_custom_call.1} parent=5 // pred_fallthru
        _
      %p269 = scmp.le.s32.totalorder 2, %s17
      // Predicated region
      $region49: #{tpu_custom_call.1} parent=5 // pred_check
        %p270 = pneg %p269
      $region50: #{tpu_custom_call.1} parent=5 // pred_check_branch
        %272 = sbr.rel (%p270) target = $region52
      $region51: #{tpu_custom_call.1} parent=5 // pred_region
        %s273 = ssub.s32 %s17, 2
        // Predicated region
        $region53: #{tpu_custom_call.1} parent=51 // pred_check
          %p274 = pneg %p114
        $region54: #{tpu_custom_call.1} parent=51 // pred_check_branch
          %276 = sbr.rel (%p274) target = $region56
        $region55: #{tpu_custom_call.1} parent=51 // pred_region
          %s277 = sand.u32 %s99, 1
          %s278 = scalar_lea.sflag [#allocation5], %s277
          %s279 = sand.u32 %s99, 1
          %s280 = smul.addr %s279, 8
          %s281 = scalar_lea.vmem [#allocation8], %s280
          %282 = dma.done %s278, 128
        $region56: #{tpu_custom_call.1} parent=51 // pred_fallthru
          _
      $region52: #{tpu_custom_call.1} parent=5 // pred_fallthru
        _
    $region6: #{tpu_custom_call.1} parent=1 // loop_footer
      %s21 = sadd.s32 1, %s17
    $region7: #{tpu_custom_call.1} parent=1 // loop_footer_branch
      %16 = sbr.rel target = $region3
    $region8: #{tpu_custom_call.1} parent=1 // loop_exit
      _
    %283 = vsyncpa [#allocation4], 1
    %s284 = scalar_lea.sflag [#allocation4], 1
    %285 = vsyncpa %s284, 1
    %286 = vsyncpa [#allocation7], 1
    %s287 = scalar_lea.sflag [#allocation7], 1
    %288 = vsyncpa %s287, 1
    %289 = vsyncpa [#allocation5], 1
    %s290 = scalar_lea.sflag [#allocation5], 1
    %291 = vsyncpa %s290, 1

</llo_original>
